<compile_context>
chip_gen: v5e
topology: v5e:2x2
jax: 0.10.0
libtpu: 0.0.40
codegen_flags: <defaults>
</compile_context>

<pallas_src>
import functools

import jax
import jax.numpy as jnp
from jax.experimental import pallas as pl
from jax.experimental.pallas import tpu as pltpu


def se_block_kernel(x_ref, p_ref, o_ref, *, c, c_pad):
    # x_ref / o_ref: (Bt, C, HWp) — HWp on lanes (mult. of 128), C on sublanes.
    # p_ref: (3*C_pad + 1, Cr) packed params; section starts are 8-aligned.
    x = x_ref[...]                                          # (Bt, C, HWp)

    # --- squeeze: per-channel sums; 1/(H*W) (true HW) folded into W1 --------
    pooled = jnp.sum(x, axis=-1, keepdims=True)             # (Bt, C, 1)  lane reduce

    # --- packed parameters (static, aligned section starts) -----------------
    w1s = p_ref[0:c, :]                                     # (C, Cr) = W1 / (H*W)
    w2t = p_ref[c_pad:c_pad + c, :]                          # (C, Cr) = W2^T
    b2c = p_ref[2 * c_pad:2 * c_pad + c, 0:1]                # (C, 1)
    b1 = p_ref[3 * c_pad:3 * c_pad + 1, :]                   # (1, Cr)

    # --- excitation MLP on VPU/XLU (kept off the MXU on purpose) ------------
    # h[b, j] = sum_c pooled[b, c] * (W1/HW)[c, j] + b1[j]
    h = jnp.sum(pooled * w1s[None], axis=1, keepdims=True) + b1[None]   # (Bt, 1, Cr)
    h = jnp.maximum(h, 0.0)
    # s[b, c] = sum_j h[b, j] * W2[j, c] + b2[c]   (kept as a column on sublanes)
    s = jnp.sum(h * w2t[None], axis=-1, keepdims=True) + b2c[None]      # (Bt, C, 1)

    # NOTE: the original module computes torch.sigmoid(s) and never uses it;
    # the applied scale is the PRE-sigmoid s, matching PyTorch exactly.

    # --- scale: lane-broadcast multiply, lane-dense (unmasked) stores --------
    o_ref[...] = x * s


def _pick_batch_tile(b, bytes_per_image, target_bytes=2 << 20):
    """Largest divisor of b whose block stays around the target size (>= 1)."""
    bt = max(1, min(b, target_bytes // max(bytes_per_image, 1)))
    while b % bt:
        bt -= 1
    return bt


@jax.jit
def se_block(x_nchw, w1, b1, w2, b2):
    """x_nchw: (B, C, H, W) f32. w1: (C, Cr), b1: (Cr,), w2: (Cr, C), b2: (C,)."""
    B, C, H, W = x_nchw.shape
    HW = H * W
    Cr = w1.shape[1]
    C_pad = ((C + 7) // 8) * 8          # only the tiny params operand is padded

    # Flatten spatial onto lanes — free reshape, NO channel pad, NO extra pass.
    x = x_nchw.reshape(B, C, HW)
    HWp = ((HW + 127) // 128) * 128
    if HWp != HW:
        # Lane-dense stores beat masked vst.msk; zero lanes don't affect the
        # pooled sum because 1/(H*W) below uses the true H*W.
        x = jnp.pad(x, ((0, 0), (0, 0), (0, HWp - HW)))

    # Pack all parameters into one sublane-aligned operand:
    #   rows [0        , C)           : W1 / (H*W)   (avg-pool folded in)
    #   rows [C_pad    , C_pad + C)   : W2^T
    #   rows [2*C_pad  , 2*C_pad + C) : b2 in column 0
    #   row   3*C_pad                 : b1
    params = jnp.zeros((3 * C_pad + 1, Cr), jnp.float32)
    params = params.at[0:C, :].set(w1 / HW)
    params = params.at[C_pad:C_pad + C, :].set(w2.T)
    params = params.at[2 * C_pad:2 * C_pad + C, 0].set(b2.reshape(-1))
    params = params.at[3 * C_pad, :].set(b1.reshape(-1))

    # Group images per grid step: ~<=2 MiB per block, divisor of B.
    bytes_per_image = C * HWp * 4
    Bt = _pick_batch_tile(B, bytes_per_image)
    block_bytes = Bt * bytes_per_image
    params_bytes = params.size * 4
    # in + out double-buffered + params, with headroom; <= v7x's scoped default,
    # >= v5e's, and far above what blocks capped at ~2 MiB can ever need.
    vmem_limit = int(min(32 << 20, max(16 << 20, 6 * block_bytes + params_bytes)))

    kernel = functools.partial(se_block_kernel, c=C, c_pad=C_pad)
    out = pl.pallas_call(
        kernel,
        out_shape=jax.ShapeDtypeStruct((B, C, HWp), jnp.float32),
        grid=(B // Bt,),
        in_specs=[
            pl.BlockSpec((Bt, C, HWp), lambda g: (g, 0, 0)),
            pl.BlockSpec((3 * C_pad + 1, Cr), lambda g: (0, 0)),
        ],
        out_specs=pl.BlockSpec((Bt, C, HWp), lambda g: (g, 0, 0)),
        compiler_params=pltpu.CompilerParams(
            dimension_semantics=("parallel",),      # shard batch groups over TCs
            vmem_limit_bytes=vmem_limit,
        ),
        # pipeline_mode=pl.Buffered(3) on the x spec is a further knob once the
        # grid has >2 steps; left at the default depth here.
    )(x, params)

    if HWp != HW:
        out = out[:, :, :HW]
    return out.reshape(B, C, H, W)


def init_params(key, n_channels=30, r=10):
    """Synthetic params matching nn.Linear shapes (stored transposed: (in, out))."""
    cr = n_channels // r
    k1, k2, k3, k4 = jax.random.split(key, 4)
    w1 = jax.random.normal(k1, (n_channels, cr), jnp.float32) * 0.1   # (C, C//r)
    b1 = jax.random.normal(k2, (cr,), jnp.float32) * 0.1
    w2 = jax.random.normal(k3, (cr, n_channels), jnp.float32) * 0.1   # (C//r, C)
    b2 = jax.random.normal(k4, (n_channels,), jnp.float32) * 0.1
    return w1, b1, w2, b2


def se_block_ref(x, w1, b1, w2, b2):
    """Pure-JAX reference mirroring the PyTorch forward (pre-sigmoid scale)."""
    pooled = jnp.mean(x, axis=(2, 3))                    # (B, C)
    h = jnp.maximum(pooled @ w1 + b1, 0.0)
    s = h @ w2 + b2                                      # pre-sigmoid, as in the module
    return x * s[:, :, None, None]


if __name__ == "__main__":
    B, C, H, W, R = 2, 30, 16, 16, 10
    key = jax.random.PRNGKey(0)
    kx, kp = jax.random.split(key)
    x = jax.random.normal(kx, (B, C, H, W), jnp.float32)
    w1, b1, w2, b2 = init_params(kp, n_channels=C, r=R)

    out = jax.block_until_ready(se_block(x, w1, b1, w2, b2))
    ref = se_block_ref(x, w1, b1, w2, b2)

    assert out.shape == (B, C, H, W)
    err = float(jnp.max(jnp.abs(out - ref)))
    assert jnp.allclose(out, ref, atol=1e-5, rtol=1e-5), err
    print("KERNEL_OK")
</pallas_src>

<mosaic_0001>
module attributes {stable_mosaic.version = 11 : i64} {
  func.func @se_block_kernel(%arg0: i32, %arg1: memref<2x30x256xf32, #tpu.memory_space<vmem>>, %arg2: memref<97x3xf32, #tpu.memory_space<vmem>>, %arg3: memref<2x30x256xf32, #tpu.memory_space<vmem>>) attributes {dimension_semantics = [#tpu.dimension_semantics<parallel>], iteration_bounds = array<i64: 1>, scalar_prefetch = 0 : i64, scratch_operands = 0 : i64, tpu.core_type = #tpu.core_type<tc>, window_params = [{transform_indices = @transform_0, window_bounds = array<i64: 2, 30, 256>}, {pipeline_mode = #tpu.pipeline_mode<synchronous>, transform_indices = @transform_1, window_bounds = array<i64: 97, 3>}, {transform_indices = @transform_2, window_bounds = array<i64: 2, 30, 256>}]} {
    %c0 = arith.constant 0 : index
    %c0_0 = arith.constant 0 : index
    %c0_1 = arith.constant 0 : index
    %0 = vector.load %arg1[%c0, %c0_0, %c0_1] : memref<2x30x256xf32, #tpu.memory_space<vmem>>, vector<2x30x256xf32>
    %cst = arith.constant dense<0.000000e+00> : vector<2x30xf32>
    %1 = vector.multi_reduction <add>, %0, %cst [2] : vector<2x30x256xf32> to vector<2x30xf32>
    %2 = vector.shape_cast %1 : vector<2x30xf32> to vector<2x30x1xf32>
    %c0_2 = arith.constant 0 : index
    %c0_3 = arith.constant 0 : index
    %3 = vector.load %arg2[%c0_2, %c0_3] : memref<97x3xf32, #tpu.memory_space<vmem>>, vector<30x3xf32>
    %c32 = arith.constant 32 : index
    %c0_4 = arith.constant 0 : index
    %4 = vector.load %arg2[%c32, %c0_4] : memref<97x3xf32, #tpu.memory_space<vmem>>, vector<30x3xf32>
    %c64 = arith.constant 64 : index
    %c0_5 = arith.constant 0 : index
    %5 = vector.load %arg2[%c64, %c0_5] : memref<97x3xf32, #tpu.memory_space<vmem>>, vector<30x1xf32>
    %c96 = arith.constant 96 : index
    %c0_6 = arith.constant 0 : index
    %6 = vector.load %arg2[%c96, %c0_6] : memref<97x3xf32, #tpu.memory_space<vmem>>, vector<1x3xf32>
    %7 = vector.shape_cast %3 : vector<30x3xf32> to vector<1x30x3xf32>
    %8 = vector.broadcast %2 : vector<2x30x1xf32> to vector<2x30x3xf32>
    %9 = vector.broadcast %7 : vector<1x30x3xf32> to vector<2x30x3xf32>
    %10 = arith.mulf %8, %9 : vector<2x30x3xf32>
    %cst_7 = arith.constant dense<0.000000e+00> : vector<2x3xf32>
    %11 = vector.multi_reduction <add>, %10, %cst_7 [1] : vector<2x30x3xf32> to vector<2x3xf32>
    %12 = vector.shape_cast %11 : vector<2x3xf32> to vector<2x1x3xf32>
    %13 = vector.shape_cast %6 : vector<1x3xf32> to vector<1x1x3xf32>
    %14 = vector.broadcast %13 : vector<1x1x3xf32> to vector<2x1x3xf32>
    %15 = arith.addf %12, %14 : vector<2x1x3xf32>
    %cst_8 = arith.constant 0.000000e+00 : f32
    %16 = vector.broadcast %cst_8 : f32 to vector<2x1x3xf32>
    %17 = arith.maximumf %15, %16 : vector<2x1x3xf32>
    %18 = vector.shape_cast %4 : vector<30x3xf32> to vector<1x30x3xf32>
    %19 = vector.broadcast %17 : vector<2x1x3xf32> to vector<2x30x3xf32>
    %20 = vector.broadcast %18 : vector<1x30x3xf32> to vector<2x30x3xf32>
    %21 = arith.mulf %19, %20 : vector<2x30x3xf32>
    %cst_9 = arith.constant dense<0.000000e+00> : vector<2x30xf32>
    %22 = vector.multi_reduction <add>, %21, %cst_9 [2] : vector<2x30x3xf32> to vector<2x30xf32>
    %23 = vector.shape_cast %22 : vector<2x30xf32> to vector<2x30x1xf32>
    %24 = vector.shape_cast %5 : vector<30x1xf32> to vector<1x30x1xf32>
    %25 = vector.broadcast %24 : vector<1x30x1xf32> to vector<2x30x1xf32>
    %26 = arith.addf %23, %25 : vector<2x30x1xf32>
    %27 = vector.broadcast %26 : vector<2x30x1xf32> to vector<2x30x256xf32>
    %28 = arith.mulf %0, %27 : vector<2x30x256xf32>
    %c0_10 = arith.constant 0 : index
    %c0_11 = arith.constant 0 : index
    %c0_12 = arith.constant 0 : index
    %29 = vector.load %arg3[%c0_10, %c0_11, %c0_12] : memref<2x30x256xf32, #tpu.memory_space<vmem>>, vector<2x30x256xf32>
    tpu.vector_store %arg3[%c0_10, %c0_11, %c0_12], %28 {strides = array<i32>} : memref<2x30x256xf32, #tpu.memory_space<vmem>>, vector<2x30x256xf32>,
    return
  }
  func.func @transform_0(%arg0: i32) -> (i32, i32, i32) {
    %c0_i32 = arith.constant 0 : i32
    %c0_i32_0 = arith.constant 0 : i32
    %c0_i32_1 = arith.constant 0 : i32
    return %arg0, %c0_i32, %c0_i32_0 : i32, i32, i32
  }
  func.func @transform_1(%arg0: i32) -> (i32, i32) {
    %c0_i32 = arith.constant 0 : i32
    %c0_i32_0 = arith.constant 0 : i32
    %c0_i32_1 = arith.constant 0 : i32
    return %c0_i32, %c0_i32_0 : i32, i32
  }
  func.func @transform_2(%arg0: i32) -> (i32, i32, i32) {
    %c0_i32 = arith.constant 0 : i32
    %c0_i32_0 = arith.constant 0 : i32
    %c0_i32_1 = arith.constant 0 : i32
    return %arg0, %c0_i32, %c0_i32_0 : i32, i32, i32
  }
}

</mosaic_0001>

<llo_original>
// kernel: se_block.1
$region0: #{se_block.1}
  #allocation0 [shape = 'u32[]', space=smem, size = 0x4, offset = 0x4, fixed_abs, tag = 'smem constant byte address 0x4 - core index']
  #allocation1 [shape = 'u32[72,128]{1,0:T(1,128)}', space=vmem, size = 0x9000, scoped, tag = 'internal scratch']
  %s0 = inlined_call_operand.vmem [shape: f32[2,30,256], index: 0, kind: input, shape index: {}]
  %s1 = inlined_call_operand.vmem [shape: f32[97,3], index: 1, kind: input, shape index: {}]
  %s2 = inlined_call_operand.vmem [shape: f32[2,30,256], index: 2, kind: output, shape index: {}]
  %s3 = sld [smem:[#allocation0]]
  $region18: #{se_block.1} parent=0
    _
  %s5 = ssub.s32 1, %s3
  %s6 = scalar_select 0, %s5, %s3
  // Predicated region
  $region2: #{se_block.1} parent=0 // pred_check
    _
  $region3: #{se_block.1} parent=0 // pred_check_branch
    %8 = sbr.rel (0) target = $region5
  $region4: #{se_block.1} parent=0 // pred_region
    _
  $region5: #{se_block.1} parent=0 // pred_fallthru
    _
  // Predicated region
  $region6: #{se_block.1} parent=0 // pred_check
    _
  $region7: #{se_block.1} parent=0 // pred_check_branch
    %10 = sbr.rel (0) target = $region9
  $region8: #{se_block.1} parent=0 // pred_region
    _
  $region9: #{se_block.1} parent=0 // pred_fallthru
    _
  %v11 = vld [vmem:[%s0] sm:$0xff]
  %v12 = vld [vmem:[%s0 + $0x8] sm:$0xff]
  %v13 = vld [vmem:[%s0 + $0x10] sm:$0xff]
  %v14 = vld [vmem:[%s0 + $0x18] sm:$0xff]
  %v15 = vld [vmem:[%s0 + $0x20] sm:$0xff]
  %v16 = vld [vmem:[%s0 + $0x28] sm:$0xff]
  %v17 = vld [vmem:[%s0 + $0x30] sm:$0x3f]
  %v18 = vld [vmem:[%s0 + $0x38] sm:$0x3f]
  %v19 = vld [vmem:[%s0 + $0x40] sm:$0xff]
  %v20 = vld [vmem:[%s0 + $0x48] sm:$0xff]
  %v21 = vld [vmem:[%s0 + $0x50] sm:$0xff]
  %v22 = vld [vmem:[%s0 + $0x58] sm:$0xff]
  %v23 = vld [vmem:[%s0 + $0x60] sm:$0xff]
  %v24 = vld [vmem:[%s0 + $0x68] sm:$0xff]
  %v25 = vld [vmem:[%s0 + $0x70] sm:$0x3f]
  %v26 = vld [vmem:[%s0 + $0x78] sm:$0x3f]
  %v27 = vadd.f32 %v11, %v12
  %28 = vadd.xlane.f32.xlu0 %v27
  %v29 = vpop.xlane.xlu0 %28
  %v30 = vadd.f32 %v13, %v14
  %31 = vadd.xlane.f32.xlu0 %v30
  %v32 = vpop.xlane.xlu0 %31
  %v33 = vadd.f32 %v15, %v16
  %34 = vadd.xlane.f32.xlu0 %v33
  %v35 = vpop.xlane.xlu0 %34
  %vm36 = vcmask 1045504
  %v37 = vsel %vm36, %v17, 0.0
  %v38 = vsel %vm36, %v18, 0.0
  %v39 = vadd.f32 %v37, %v38
  %40 = vadd.xlane.f32.xlu0 %v39
  %v41 = vpop.xlane.xlu0 %40
  %v42 = vadd.f32 %v19, %v20
  %43 = vadd.xlane.f32.xlu0 %v42
  %v44 = vpop.xlane.xlu0 %43
  %v45 = vadd.f32 %v21, %v22
  %46 = vadd.xlane.f32.xlu0 %v45
  %v47 = vpop.xlane.xlu0 %46
  %v48 = vadd.f32 %v23, %v24
  %49 = vadd.xlane.f32.xlu0 %v48
  %v50 = vpop.xlane.xlu0 %49
  %v51 = vsel %vm36, %v25, 0.0
  %v52 = vsel %vm36, %v26, 0.0
  %v53 = vadd.f32 %v51, %v52
  %54 = vadd.xlane.f32.xlu0 %v53
  %v55 = vpop.xlane.xlu0 %54
  %v56 = vld [vmem:[%s1] sm:$0xff]
  %v57 = vld [vmem:[%s1 + $0x8] sm:$0xff]
  %v58 = vld [vmem:[%s1 + $0x10] sm:$0xff]
  %v59 = vld [vmem:[%s1 + $0x18] sm:$0x3f]
  %v60 = vld [vmem:[%s1 + $0x20] sm:$0xff]
  %v61 = vld [vmem:[%s1 + $0x28] sm:$0xff]
  %v62 = vld [vmem:[%s1 + $0x30] sm:$0xff]
  %v63 = vld [vmem:[%s1 + $0x38] sm:$0x3f]
  %v64 = vld [vmem:[%s1 + $0x40] sm:$0xff]
  %v65 = vld [vmem:[%s1 + $0x48] sm:$0xff]
  %v66 = vld [vmem:[%s1 + $0x50] sm:$0xff]
  %v67 = vld [vmem:[%s1 + $0x58] sm:$0x3f]
  %v68 = vld [vmem:[%s1 + $0x60] sm:$0x1]
  %v69 = vmul.f32 %v29, %v56
  %v70 = vmul.f32 %v32, %v57
  %v71 = vmul.f32 %v35, %v58
  %v72 = vmul.f32 %v41, %v59
  %v73 = vmul.f32 %v44, %v56
  %v74 = vmul.f32 %v47, %v57
  %v75 = vmul.f32 %v50, %v58
  %v76 = vmul.f32 %v55, %v59
  %vm77 = vcmask 23552
  %v78 = vsel %vm77, %v69, 0.0
  %v79 = vsel %vm77, %v70, 0.0
  %v80 = vadd.f32 %v78, %v79
  %v81 = vsel %vm77, %v71, 0.0
  %v82 = vadd.f32 %v80, %v81
  %vm83 = vcmask 21504
  %v84 = vsel %vm83, %v72, 0.0
  %v85 = vadd.f32 %v82, %v84
  %v86 = vrot.slane %v85, 4
  %v87 = vadd.f32 %v85, %v86
  %v88 = vrot.slane %v87, 2
  %v89 = vadd.f32 %v87, %v88
  %v90 = vrot.slane %v89, 1
  %v91 = vadd.f32 %v89, %v90
  %v92 = vsel %vm77, %v73, 0.0
  %v93 = vsel %vm77, %v74, 0.0
  %v94 = vadd.f32 %v92, %v93
  %v95 = vsel %vm77, %v75, 0.0
  %v96 = vadd.f32 %v94, %v95
  %v97 = vsel %vm83, %v76, 0.0
  %v98 = vadd.f32 %v96, %v97
  %v99 = vrot.slane %v98, 4
  %v100 = vadd.f32 %v98, %v99
  %v101 = vrot.slane %v100, 2
  %v102 = vadd.f32 %v100, %v101
  %v103 = vrot.slane %v102, 1
  %v104 = vadd.f32 %v102, %v103
  %v105 = vadd.f32 %v91, %v68
  %v106 = vadd.f32 %v104, %v68
  %v107 = vmax.f32 %v105, 0.0
  %v108 = vmax.f32 %v106, 0.0
  %v109 = vperm.slane %v107, 0
  %v110 = vperm.slane %v108, 0
  %v111 = vmul.f32 %v109, %v60
  %v112 = vmul.f32 %v109, %v61
  %v113 = vmul.f32 %v109, %v62
  %v114 = vmul.f32 %v109, %v63
  %v115 = vmul.f32 %v110, %v60
  %v116 = vmul.f32 %v110, %v61
  %v117 = vmul.f32 %v110, %v62
  %v118 = vmul.f32 %v110, %v63
  %v119 = vsel %vm77, %v111, 0.0
  %120 = vadd.xlane.f32.xlu0 %v119
  %v121 = vpop.xlane.xlu0 %120
  %v122 = vsel %vm77, %v112, 0.0
  %123 = vadd.xlane.f32.xlu0 %v122
  %v124 = vpop.xlane.xlu0 %123
  %v125 = vsel %vm77, %v113, 0.0
  %126 = vadd.xlane.f32.xlu0 %v125
  %v127 = vpop.xlane.xlu0 %126
  %v128 = vsel %vm83, %v114, 0.0
  %129 = vadd.xlane.f32.xlu0 %v128
  %v130 = vpop.xlane.xlu0 %129
  %v131 = vsel %vm77, %v115, 0.0
  %132 = vadd.xlane.f32.xlu0 %v131
  %v133 = vpop.xlane.xlu0 %132
  %v134 = vsel %vm77, %v116, 0.0
  %135 = vadd.xlane.f32.xlu0 %v134
  %v136 = vpop.xlane.xlu0 %135
  %v137 = vsel %vm77, %v117, 0.0
  %138 = vadd.xlane.f32.xlu0 %v137
  %v139 = vpop.xlane.xlu0 %138
  %v140 = vsel %vm83, %v118, 0.0
  %141 = vadd.xlane.f32.xlu0 %v140
  %v142 = vpop.xlane.xlu0 %141
  %v143 = vadd.f32 %v121, %v64
  %v144 = vadd.f32 %v124, %v65
  %v145 = vadd.f32 %v127, %v66
  %v146 = vadd.f32 %v130, %v67
  %v147 = vadd.f32 %v133, %v64
  %v148 = vadd.f32 %v136, %v65
  %v149 = vadd.f32 %v139, %v66
  %v150 = vadd.f32 %v142, %v67
  %152 = vset.pattern.permute.xlu0 0
  %153 = vperm.xlu0 %152, %v143
  %v154 = vpop.permute.xlu0 %153
  %157 = vset.pattern.permute.xlu0 0
  %158 = vperm.xlu0 %157, %v144
  %v159 = vpop.permute.xlu0 %158
  %162 = vset.pattern.permute.xlu0 0
  %163 = vperm.xlu0 %162, %v145
  %v164 = vpop.permute.xlu0 %163
  %167 = vset.pattern.permute.xlu0 0
  %168 = vperm.xlu0 %167, %v146
  %v169 = vpop.permute.xlu0 %168
  %172 = vset.pattern.permute.xlu0 0
  %173 = vperm.xlu0 %172, %v147
  %v174 = vpop.permute.xlu0 %173
  %177 = vset.pattern.permute.xlu0 0
  %178 = vperm.xlu0 %177, %v148
  %v179 = vpop.permute.xlu0 %178
  %182 = vset.pattern.permute.xlu0 0
  %183 = vperm.xlu0 %182, %v149
  %v184 = vpop.permute.xlu0 %183
  %187 = vset.pattern.permute.xlu0 0
  %188 = vperm.xlu0 %187, %v150
  %v189 = vpop.permute.xlu0 %188
  %v191 = vmul.f32 %v11, %v154
  %v192 = vmul.f32 %v12, %v154
  %v193 = vmul.f32 %v13, %v159
  %v194 = vmul.f32 %v14, %v159
  %v195 = vmul.f32 %v15, %v164
  %v196 = vmul.f32 %v16, %v164
  %v197 = vmul.f32 %v17, %v169
  %v198 = vmul.f32 %v18, %v169
  %v199 = vmul.f32 %v19, %v174
  %v200 = vmul.f32 %v20, %v174
  %v201 = vmul.f32 %v21, %v179
  %v202 = vmul.f32 %v22, %v179
  %v203 = vmul.f32 %v23, %v184
  %v204 = vmul.f32 %v24, %v184
  %v205 = vmul.f32 %v25, %v189
  %v206 = vmul.f32 %v26, %v189
  %207 = vst [vmem:[%s2] sm:$0xff] %v191
  %208 = vst [vmem:[%s2 + $0x8] sm:$0xff] %v192
  %209 = vst [vmem:[%s2 + $0x10] sm:$0xff] %v193
  %210 = vst [vmem:[%s2 + $0x18] sm:$0xff] %v194
  %211 = vst [vmem:[%s2 + $0x20] sm:$0xff] %v195
  %212 = vst [vmem:[%s2 + $0x28] sm:$0xff] %v196
  %213 = vst [vmem:[%s2 + $0x30] sm:$0x3f] %v197
  %214 = vst [vmem:[%s2 + $0x38] sm:$0x3f] %v198
  %215 = vst [vmem:[%s2 + $0x40] sm:$0xff] %v199
  %216 = vst [vmem:[%s2 + $0x48] sm:$0xff] %v200
  %217 = vst [vmem:[%s2 + $0x50] sm:$0xff] %v201
  %218 = vst [vmem:[%s2 + $0x58] sm:$0xff] %v202
  %219 = vst [vmem:[%s2 + $0x60] sm:$0xff] %v203
  %220 = vst [vmem:[%s2 + $0x68] sm:$0xff] %v204
  %221 = vst [vmem:[%s2 + $0x70] sm:$0x3f] %v205
  %222 = vst [vmem:[%s2 + $0x78] sm:$0x3f] %v206
  // Predicated region
  $region10: #{se_block.1} parent=0 // pred_check
    _
  $region11: #{se_block.1} parent=0 // pred_check_branch
    %224 = sbr.rel (0) target = $region13
  $region12: #{se_block.1} parent=0 // pred_region
    _
  $region13: #{se_block.1} parent=0 // pred_fallthru
    _
  // Predicated region
  $region14: #{se_block.1} parent=0 // pred_check
    _
  $region15: #{se_block.1} parent=0 // pred_check_branch
    %226 = sbr.rel (0) target = $region17
  $region16: #{se_block.1} parent=0 // pred_region
    _
  $region17: #{se_block.1} parent=0 // pred_fallthru
    _

</llo_original>
